<compile_context>
chip_gen: v6e
topology: v6e:2x2x1
jax: 0.10.0
libtpu: 0.0.40
codegen_flags: <defaults>
</compile_context>

<pallas_src>
import jax
import jax.numpy as jnp
from jax.experimental import pallas as pl
from jax.experimental.pallas import tpu as pltpu

_LANE = 128


def _cdiv(a, b):
    return -(-a // b)


def _snake_kernel(a_ref, inv_a_ref, x_ref, o_ref):
    # a_ref / inv_a_ref: (tR, 1) f32 per-row scalars (resident across the t axis)
    # x_ref / o_ref:     (tR, tT)
    a = a_ref[...]
    inv_a = inv_a_ref[...]
    x = x_ref[...].astype(jnp.float32)
    s = jnp.sin(x * a)                 # alpha WITHOUT eps inside sin (matches torch)
    o_ref[...] = (x + (s * s) * inv_a).astype(o_ref.dtype)
    # TODO(synk): optional bf16 compute path for bf16 I/O on v6e/v7x (VALU-bound
    # regime); kept in f32 so the kernel matches the torch reference to 1e-5.


def snake_forward(x, alpha_param, *, logscale: bool = True, eps: float = 1e-6):
    """Pallas Snake forward.

    x:           (N, C, T) — any float dtype (bf16 I/O supported; math in f32).
    alpha_param: (C,)      — raw parameter (log-scale if logscale=True), matching
                             the PyTorch nn.Parameter of shape (channels,).
    """
    N, C, T = x.shape
    R = N * C
    itemsize = jnp.dtype(x.dtype).itemsize
    sub = 8 if itemsize >= 4 else (16 if itemsize == 2 else 32)   # sublane pack

    # --- per-channel scalars, hoisted & broadcast to rows of the (N*C, T) view ---
    a = alpha_param.astype(jnp.float32)
    if logscale:
        a = jnp.exp(a)
    inv_a = 1.0 / (a + eps)
    a_rows = jnp.tile(a, N).reshape(R, 1)        # row r = n*C + c  ->  alpha[c]
    inv_rows = jnp.tile(inv_a, N).reshape(R, 1)

    x2 = x.reshape(R, T)                         # free view, no copy

    # --- generation-aware VMEM budget (safe on v7x's 64 MiB per-TC) ---
    try:
        vmem_cap = int(pltpu.get_tpu_info().vmem_capacity_bytes)
    except Exception:
        vmem_cap = 64 << 20                      # conservative default (v7x)
    io_budget = min(vmem_cap // 3, 24 << 20)     # 2 operands x 2 pipeline buffers
    max_block_bytes = io_budget // 4             # per single block buffer

    # --- lane tile: multiple of 128 (or full T when T < 128), prefer 512-2048 ---
    if T < _LANE:
        tT = T                                   # full dim (masked vst, unavoidable)
    else:
        tT_max = (T // _LANE) * _LANE            # largest multiple of 128 <= T
        tT = _LANE
        for cand in (2048, 1024, 512, 256, 128):
            if cand <= tT_max and sub * cand * itemsize <= max_block_bytes:
                tT = cand
                break

    # --- row tile: multiple of the sublane pack (or full R), fills block budget ---
    if R <= sub:
        tR = R
    else:
        rows_fit = max(max_block_bytes // (tT * itemsize), sub)
        tR = R if rows_fit >= R else max((rows_fit // sub) * sub, sub)

    grid = (_cdiv(R, tR), _cdiv(T, tT))

    # Real accounting: in+out double buffers + alpha/inv_alpha buffers + headroom.
    vmem_needed = 4 * tR * tT * itemsize + 8 * tR * 4
    vmem_limit = int(min(max(vmem_needed + (2 << 20), 16 << 20),
                         48 << 20, vmem_cap - (16 << 20)))

    n_elem = R * T
    cost = pl.CostEstimate(
        flops=5 * n_elem,
        transcendentals=n_elem,
        bytes_accessed=2 * n_elem * itemsize + 2 * R * 4,
    )

    out2 = pl.pallas_call(
        _snake_kernel,
        out_shape=jax.ShapeDtypeStruct((R, T), x.dtype),
        grid_spec=pltpu.PrefetchScalarGridSpec(
            num_scalar_prefetch=0,
            grid=grid,
            in_specs=[
                pl.BlockSpec((tR, 1), lambda r, t: (r, 0)),     # exp(alpha) per row
                pl.BlockSpec((tR, 1), lambda r, t: (r, 0)),     # 1/(alpha+eps) per row
                pl.BlockSpec((tR, tT), lambda r, t: (r, t)),    # x tile
            ],
            out_specs=pl.BlockSpec((tR, tT), lambda r, t: (r, t)),
        ),
        compiler_params=pltpu.CompilerParams(
            dimension_semantics=("parallel", "parallel"),
            vmem_limit_bytes=vmem_limit,
        ),
        cost_estimate=cost,
    )(a_rows, inv_rows, x2)

    return out2.reshape(N, C, T)


def snake_reference(x, alpha_param, *, logscale: bool = True, eps: float = 1e-6):
    a = alpha_param.astype(jnp.float32)[None, :, None]
    if logscale:
        a = jnp.exp(a)
    xf = x.astype(jnp.float32)
    y = xf + 1.0 / (a + eps) * jnp.sin(xf * a) ** 2
    return y.astype(x.dtype)


if __name__ == "__main__":
    key = jax.random.PRNGKey(0)
    k0, k1, k2, k3 = jax.random.split(key, 4)

    # 1) Small deterministic case matching the module spec (batch=2, channels=4, T=16).
    N, C, T = 2, 4, 16
    x = jax.random.normal(k0, (N, C, T), dtype=jnp.float32)
    alpha_param = jnp.zeros((C,), jnp.float32) + 0.1 * jnp.arange(C, dtype=jnp.float32)
    out = jax.block_until_ready(snake_forward(x, alpha_param, logscale=True, eps=1e-6))
    ref = snake_reference(x, alpha_param, logscale=True, eps=1e-6)
    assert out.shape == ref.shape and out.dtype == ref.dtype
    assert jnp.allclose(out, ref, atol=1e-5, rtol=1e-5), "mismatch vs reference (small)"

    # 2) T not a multiple of 128 -> exercises the masked boundary lane block (no pad/slice).
    N2, C2, T2 = 2, 12, 1000
    x2 = jax.random.normal(k1, (N2, C2, T2), dtype=jnp.float32)
    a2 = 0.01 * jnp.arange(C2, dtype=jnp.float32)
    out2 = jax.block_until_ready(snake_forward(x2, a2))
    ref2 = snake_reference(x2, a2)
    assert jnp.allclose(out2, ref2, atol=1e-5, rtol=1e-5), "mismatch vs reference (boundary T)"

    # 3) Odd row count (N*C=5) and T=300 -> full-row block + masked boundary lane block.
    N3, C3, T3 = 1, 5, 300
    x3 = jax.random.normal(k2, (N3, C3, T3), dtype=jnp.float32)
    a3 = jnp.linspace(-0.2, 0.3, C3, dtype=jnp.float32)
    out3 = jax.block_until_ready(snake_forward(x3, a3))
    ref3 = snake_reference(x3, a3)
    assert jnp.allclose(out3, ref3, atol=1e-5, rtol=1e-5), "mismatch vs reference (odd C)"

    # 4) bf16 I/O path (math in f32, cast on store).
    N4, C4, T4 = 2, 16, 384
    x4 = jax.random.normal(k3, (N4, C4, T4), dtype=jnp.bfloat16)
    a4 = 0.02 * jnp.arange(C4, dtype=jnp.float32)
    out4 = jax.block_until_ready(snake_forward(x4, a4))
    ref4 = snake_reference(x4, a4)
    assert out4.dtype == jnp.bfloat16
    assert jnp.allclose(out4.astype(jnp.float32), ref4.astype(jnp.float32),
                        atol=5e-2, rtol=5e-2), "mismatch vs reference (bf16)"

    print("KERNEL_OK")
</pallas_src>

<mosaic_0001>
module attributes {stable_mosaic.version = 11 : i64} {
  func.func @_snake_kernel(%arg0: i32, %arg1: i32, %arg2: memref<8x1xf32, #tpu.memory_space<vmem>>, %arg3: memref<8x1xf32, #tpu.memory_space<vmem>>, %arg4: memref<8x16xf32, #tpu.memory_space<vmem>>, %arg5: memref<8x16xf32, #tpu.memory_space<vmem>>) attributes {dimension_semantics = [#tpu.dimension_semantics<parallel>, #tpu.dimension_semantics<parallel>], iteration_bounds = array<i64: 1, 1>, scalar_prefetch = 0 : i64, scratch_operands = 0 : i64, tpu.core_type = #tpu.core_type<tc>, window_params = [{transform_indices = @transform_0, window_bounds = array<i64: 8, 1>}, {transform_indices = @transform_1, window_bounds = array<i64: 8, 1>}, {transform_indices = @transform_2, window_bounds = array<i64: 8, 16>}, {transform_indices = @transform_3, window_bounds = array<i64: 8, 16>}]} {
    %c0 = arith.constant 0 : index
    %c0_0 = arith.constant 0 : index
    %0 = vector.load %arg2[%c0, %c0_0] : memref<8x1xf32, #tpu.memory_space<vmem>>, vector<8x1xf32>
    %c0_1 = arith.constant 0 : index
    %c0_2 = arith.constant 0 : index
    %1 = vector.load %arg3[%c0_1, %c0_2] : memref<8x1xf32, #tpu.memory_space<vmem>>, vector<8x1xf32>
    %c0_3 = arith.constant 0 : index
    %c0_4 = arith.constant 0 : index
    %2 = vector.load %arg4[%c0_3, %c0_4] : memref<8x16xf32, #tpu.memory_space<vmem>>, vector<8x16xf32>
    %3 = vector.broadcast %0 : vector<8x1xf32> to vector<8x16xf32>
    %4 = arith.mulf %2, %3 : vector<8x16xf32>
    %5 = math.sin %4 : vector<8x16xf32>
    %6 = arith.mulf %5, %5 : vector<8x16xf32>
    %7 = vector.broadcast %1 : vector<8x1xf32> to vector<8x16xf32>
    %8 = arith.mulf %6, %7 : vector<8x16xf32>
    %9 = arith.addf %2, %8 : vector<8x16xf32>
    %c0_5 = arith.constant 0 : index
    %c0_6 = arith.constant 0 : index
    %10 = vector.load %arg5[%c0_5, %c0_6] : memref<8x16xf32, #tpu.memory_space<vmem>>, vector<8x16xf32>
    tpu.vector_store %arg5[%c0_5, %c0_6], %9 {strides = array<i32>} : memref<8x16xf32, #tpu.memory_space<vmem>>, vector<8x16xf32>,
    return
  }
  func.func @transform_0(%arg0: i32, %arg1: i32) -> (i32, i32) {
    %c0_i32 = arith.constant 0 : i32
    %c0_i32_0 = arith.constant 0 : i32
    return %arg0, %c0_i32 : i32, i32
  }
  func.func @transform_1(%arg0: i32, %arg1: i32) -> (i32, i32) {
    %c0_i32 = arith.constant 0 : i32
    %c0_i32_0 = arith.constant 0 : i32
    return %arg0, %c0_i32 : i32, i32
  }
  func.func @transform_2(%arg0: i32, %arg1: i32) -> (i32, i32) {
    %c0_i32 = arith.constant 0 : i32
    return %arg0, %arg1 : i32, i32
  }
  func.func @transform_3(%arg0: i32, %arg1: i32) -> (i32, i32) {
    %c0_i32 = arith.constant 0 : i32
    return %arg0, %arg1 : i32, i32
  }
}

</mosaic_0001>

<llo_original>
// kernel: tpu_custom_call.1
$region0: #{tpu_custom_call.1}
  #allocation0 [shape = 'u32[]', space=smem, size = 0x4, offset = 0x4, fixed_abs, tag = 'smem constant byte address 0x4 - core index']
  #allocation1 [shape = 'u32[144,128]{1,0:T(1,128)}', space=vmem, size = 0x12000, scoped, tag = 'internal scratch']
  %s0 = inlined_call_operand.vmem [shape: f32[8,1], index: 0, kind: input, shape index: {}]
  %s1 = inlined_call_operand.vmem [shape: f32[8,1], index: 1, kind: input, shape index: {}]
  %s2 = inlined_call_operand.vmem [shape: f32[8,16], index: 2, kind: input, shape index: {}]
  %s3 = inlined_call_operand.hbm [shape: f32[8,16], index: 3, kind: output, shape index: {}]
  %s4 = sld [smem:[#allocation0]]
  $region22: #{tpu_custom_call.1} parent=0
    _
  %s6 = ssub.s32 1, %s4
  %s7 = scalar_select 0, %s6, %s4
  $region1: #{tpu_custom_call.1} parent=0
    #allocation2 [shape = 'u8[4096]{0}', space=vmem, size = 0x1000, scoped, tag = 'output window, operand 0, single buffered']
    #allocation3 [shape = 's32[1]{0}', space=sflag, size = 0x4, scoped, tag = 'scoped memory for tpu_custom_call.1']
    %8 = vsyncpa [#allocation3], 0
    // Predicated region
    $region2: #{tpu_custom_call.1} parent=1 // pred_check
      _
    $region3: #{tpu_custom_call.1} parent=1 // pred_check_branch
      %10 = sbr.rel (0) target = $region5
    $region4: #{tpu_custom_call.1} parent=1 // pred_region
      _
    $region5: #{tpu_custom_call.1} parent=1 // pred_fallthru
      _
    // Predicated region
    $region6: #{tpu_custom_call.1} parent=1 // pred_check
      _
    $region7: #{tpu_custom_call.1} parent=1 // pred_check_branch
      %12 = sbr.rel (0) target = $region9
    $region8: #{tpu_custom_call.1} parent=1 // pred_region
      _
    $region9: #{tpu_custom_call.1} parent=1 // pred_fallthru
      _
    // Predicated region
    $region10: #{tpu_custom_call.1} parent=1 // pred_check
      _
    $region11: #{tpu_custom_call.1} parent=1 // pred_check_branch
      %14 = sbr.rel (0) target = $region13
    $region12: #{tpu_custom_call.1} parent=1 // pred_region
      _
    $region13: #{tpu_custom_call.1} parent=1 // pred_fallthru
      _
    %v15 = vld [vmem:[%s0] sm:$0xff]
    %v16 = vld [vmem:[%s1] sm:$0xff]
    %v17 = vld [vmem:[%s2] sm:$0xff]
    %19 = vset.pattern.permute.xlu0 0
    %20 = vperm.xlu0 %19, %v15
    %v21 = vpop.permute.xlu0 %20
    %v23 = vmul.f32 %v17, %v21
    %v24 = vand.u32 2147483647, %v23
    %vm25 = vcmp.le.f32.partialorder %v24, 0.7853982
    %vm26 = vcmp.lt.s32.totalorder %v23, 0
    %v27 = vand.u32 %v23, 2139095040
    %v28 = vshrl.u32 %v27, 23
    %v29 = vsub.s32 %v28, 127
    %v30 = vand.u32 2147483647, %v23
    %v31 = vand.u32 %v30, 8388607
    %v32 = vor.u32 %v31, 8388608
    %v33 = vsub.s32 0, %v32
    %v34 = vadd.s32 %v29, 1
    %vm35 = vcmp.gt.s32.totalorder %v34, 0
    %v36 = vsel %vm35, %v34, 0
    %v37 = vshrl.u32 %v36, 5
    %v38 = vand.u32 %v36, 31
    %v39 = vsub.s32 32, %v38
    %v40 = vshrl.u32 683565275, %v39
    %v41 = vshll.u32 683565275, %v38
    %v42 = vshrl.u32 2475754826, %v39
    %v43 = vor.u32 %v41, %v42
    %v44 = vshll.u32 2475754826, %v38
    %v45 = vshrl.u32 2131351028, %v39
    %v46 = vor.u32 %v44, %v45
    %v47 = vshll.u32 2131351028, %v38
    %v48 = vshrl.u32 2102212464, %v39
    %v49 = vor.u32 %v47, %v48
    %v50 = vshll.u32 2102212464, %v38
    %v51 = vshrl.u32 920167782, %v39
    %v52 = vor.u32 %v50, %v51
    %v53 = vshll.u32 920167782, %v38
    %v54 = vshrl.u32 1326507024, %v39
    %v55 = vor.u32 %v53, %v54
    %vm56 = vcmp.lt.s32.totalorder %v37, 1
    %vm57 = vcmp.lt.s32.totalorder %v37, 2
    %vm58 = vcmp.lt.s32.totalorder %v37, 3
    %vm59 = vcmp.lt.s32.totalorder %v37, 4
    %v60 = vsel %vm56, %v40, %v43
    %v61 = vsel %vm59, %v49, 2102212464
    %v62 = vsel %vm58, %v46, %v61
    %v63 = vsel %vm57, %v60, %v62
    %v64 = vsel %vm56, %v43, %v46
    %v65 = vsel %vm59, %v52, 920167782
    %v66 = vsel %vm58, %v49, %v65
    %v67 = vsel %vm57, %v64, %v66
    %v68 = vsel %vm56, %v46, %v49
    %v69 = vsel %vm59, %v55, 1326507024
    %v70 = vsel %vm58, %v52, %v69
    %v71 = vsel %vm57, %v68, %v70
    %v72 = vshll.u32 %v32, 8
    %v73 = vmul.u32.u64.compose %v72, %v71
    %v74 = vextract.low.u32 %v73
    %v75 = vextract.high.u32 %v73
    %v76 = vmul.u32.u64.compose %v72, %v67
    %v77 = vextract.low.u32 %v76
    %v78 = vextract.high.u32 %v76
    %v79 = vmul.u32 %v72, %v63
    %v80 = vadd.s32 %v75, %v77
    %vm81 = vc.u32 %v75, %v77
    %v82 = vadd.s32 %v78, 1
    %v83 = vsel %vm81, %v82, %v78
    %v84 = vadd.s32 %v79, %v83
    %v85 = vadd.s32 %v84, 536870912
    %v86 = vshrl.u32 %v85, 30
    %v87 = vshll.u32 %v86, 30
    %v88 = vsub.s32 %v84, %v87
    %vm89 = vcmp.lt.s32.totalorder %v88, 0
    %v90 = vsub.s32 0, %v88
    %v91 = vsel %vm89, %v90, %v88
    %v92 = vclz %v91
    %v93 = vsub.s32 %v92, 2
    %vm94 = vcmp.gt.s32.totalorder 0, %v93
    %v95 = vsel %vm94, 0, %v93
    %v96 = vsub.s32 32, %v95
    %v97 = vshll.u32 %v88, %v95
    %v98 = vshrl.u32 %v80, %v96
    %v99 = vor.u32 %v97, %v98
    %v100 = vsub.s32 4294967266, %v95
    %v101 = vadd.s32 %v100, 127
    %v102 = vshll.u32 %v101, 23
    %v103 = vor.u32 4788187, %v102
    %v104 = vand.u32 2147483647, %v103
    %v106 = vcvt.s32.f32 %v99
    %v107 = vmul.f32 %v106, %v104
    %v108 = vxor.u32 %v107, 2147483648
    %v109 = vsel %vm26, %v108, %v107
    %v110 = vsub.s32 4, %v86
    %v111 = vsel %vm26, %v110, %v86
    %v112 = vsel %vm25, %v23, %v109
    %v113 = vsel %vm25, 0, %v111
    %v114 = vcosq.f32.pop %v112
    %v115 = vsinq.f32.pop %v112
    %vm116 = vweird.f32 %v23
    %v117 = vadd.s32 %v113, 3
    %v118 = vand.u32 %v117, 3
    %vm119 = vcmp.lt.s32.totalorder %v118, 2
    %vm120 = vcmp.eq.s32.totalorder %v118, 0
    %v121 = vxor.u32 %v115, 2147483648
    %v122 = vsel %vm120, %v114, %v121
    %vm123 = vcmp.eq.s32.totalorder %v118, 2
    %v124 = vxor.u32 %v114, 2147483648
    %v125 = vsel %vm123, %v124, %v115
    %v126 = vsel %vm119, %v122, %v125
    %v127 = vsel %vm116, nan, %v126
    %v128 = vmul.f32 %v127, %v127
    %130 = vset.pattern.permute.xlu0 0
    %131 = vperm.xlu0 %130, %v16
    %v132 = vpop.permute.xlu0 %131
    %v134 = vmul.f32 %v128, %v132
    %v135 = vadd.f32 %v17, %v134
    %vm136 = vcmask 130048
    %137 = vst.msk [vmem:[#allocation2] sm:$0xff] %vm136, %v135
    // Predicated region
    $region14: #{tpu_custom_call.1} parent=1 // pred_check
      _
    $region15: #{tpu_custom_call.1} parent=1 // pred_check_branch
      %139 = sbr.rel (0) target = $region17
    $region16: #{tpu_custom_call.1} parent=1 // pred_region
      %s141 = ssub.s32 128, 128
      %142 = vsyncadd [#allocation3], %s141
      %s144 = sshll.u32 [#allocation2], 4
      %s145 = int_to_ptr.vmem [resolvable:$true] %s144
      %147 = dma.vmem_to_hbm [thread:$0]  %s145, 128, %s3, [#allocation3]
    $region17: #{tpu_custom_call.1} parent=1 // pred_fallthru
      _
    // Predicated region
    $region18: #{tpu_custom_call.1} parent=1 // pred_check
      _
    $region19: #{tpu_custom_call.1} parent=1 // pred_check_branch
      %149 = sbr.rel (0) target = $region21
    $region20: #{tpu_custom_call.1} parent=1 // pred_region
      %150 = dma.done [#allocation3], 128
    $region21: #{tpu_custom_call.1} parent=1 // pred_fallthru
      _
    %151 = vsyncpa [#allocation3], 1

</llo_original>
